<compile_context>
chip_gen: v5e
topology: v5e:2x2
jax: 0.10.0
libtpu: 0.0.40
codegen_flags: <defaults>
</compile_context>

<pallas_src>
import functools

import jax
import jax.numpy as jnp
from jax.experimental import pallas as pl
from jax.experimental.pallas import tpu as pltpu


def _focal_dice_kernel(x_ref, tgt_ref,
                       focal_ref, count_ref, inter_ref, card_ref,
                       *, num_classes, tile_h, acc_rows, gamma, ignore_index,
                       steps_per_chunk, hp_valid, needs_pad_mask):
    h = pl.program_id(2)

    # Zero the resident accumulators at the start of each (batch, chunk) segment.
    @pl.when(h == 0)
    def _():
        focal_ref[...] = jnp.zeros_like(focal_ref)
        count_ref[...] = jnp.zeros_like(count_ref)
        inter_ref[...] = jnp.zeros_like(inter_ref)
        card_ref[...] = jnp.zeros_like(card_ref)

    tgt = tgt_ref[0]                                        # (tile_h, Wp) int32

    # Fold rows (tile_h, Wp) -> (acc_rows, Wp) with sublane-aligned VPU slab adds
    # (identity when the accumulator keeps the full tile height, i.e. tiny images).
    if acc_rows == tile_h:
        def fold(a):
            return a
    else:                                                   # tile_h % 8 == 0, acc_rows == 8
        def fold(a):
            acc = a[0:8, :]
            for r in range(8, tile_h, 8):
                acc = acc + a[r:r + 8, :]
            return acc

    # ---- class-axis max: statically unrolled elementwise maximum chain (VPU) ----
    # TODO(synk): for very large num_classes (C >~ 32) chunk the class loops (extra grid axis
    # + two-pass softmax) instead of fully unrolling; fine for typical segmentation C.
    m = x_ref[0, 0].astype(jnp.float32)
    for c in range(1, num_classes):
        m = jnp.maximum(m, x_ref[0, c].astype(jnp.float32))

    # ---- pass 1: softmax denominator + target-class shifted logit (no per-class cache) ----
    s = jnp.zeros_like(m)
    zt = jnp.zeros_like(m)
    for c in range(num_classes):
        z_c = x_ref[0, c].astype(jnp.float32) - m
        s = s + jnp.exp(z_c)
        zt = jnp.where(tgt == c, z_c, zt)

    # EUP approximate reciprocal + one Newton refinement (keeps ~f32 accuracy, divide off VALU).
    r0 = pl.reciprocal(s, approx=True)
    inv_s = r0 * (2.0 - s * r0)
    log_s = jnp.log(s)

    valid_b = tgt != ignore_index
    if needs_pad_mask:
        row0 = (pl.program_id(1) * steps_per_chunk + h) * tile_h
        rows = row0 + jax.lax.broadcasted_iota(jnp.int32, tgt.shape, 0)
        pad_ok = rows < hp_valid
        inv_s = jnp.where(pad_ok, inv_s, 0.0)   # padded rows contribute nothing to dice
        valid_b = jnp.logical_and(valid_b, pad_ok)

    logpt = zt - log_s                           # log softmax at the target class
    pt = jnp.exp(zt) * inv_s                     # softmax prob at the target class (1 extra exp)
    valid = valid_b.astype(jnp.float32)

    # ---- pass 2: per-class dice accumulators (e_c recomputed; no live es cache) ----
    for c in range(num_classes):
        e_c = jnp.exp(x_ref[0, c].astype(jnp.float32) - m)
        p_c = e_c * inv_s
        is_c = tgt == c
        inter_ref[0, c] += fold(jnp.where(is_c, pt, 0.0))
        card_ref[0, c] += fold(p_c + is_c.astype(jnp.float32))

    # ---- focal term ----
    one_minus_pt = 1.0 - pt
    if float(gamma) == int(gamma) and gamma >= 0:
        g = int(gamma)                                       # gamma=2 -> a single multiply
        w = jnp.ones_like(one_minus_pt) if g == 0 else one_minus_pt
        for _ in range(max(g - 1, 0)):
            w = w * one_minus_pt
    else:
        w = jnp.maximum(one_minus_pt, 0.0) ** gamma
    focal_elem = -(w * logpt) * valid

    focal_ref[0] += fold(focal_elem)
    count_ref[0] += fold(valid)


def _vmem_budgets():
    """Chip-aware (tiling_budget_bytes, vmem_limit_bytes)."""
    total = None
    try:
        total = getattr(pltpu.get_tpu_info(), "vmem_capacity_bytes", None)
    except Exception:
        total = None
    if not total:
        total = 64 << 20                       # conservative (v7x-class) default
    if total >= (100 << 20):                   # 128-MiB parts: v5e / v6e
        return 64 << 20, 96 << 20
    return 28 << 20, 40 << 20                  # 64-MiB parts: v7x


def _choose_tile(hp, per_row_bytes, resident8_bytes, budget_bytes):
    """Return (hp_padded, tile_h, acc_rows) — largest multiple-of-8 tile whose full working
    set (streamed blocks + temporaries + resident accumulators, double-buffered) fits."""
    if hp <= 8:
        # Tiny image: one full-height tile, accumulate at full tile height (no fold needed).
        return hp, hp, hp
    hp_pad = ((hp + 7) // 8) * 8
    cands = [d for d in range(8, hp_pad + 1, 8) if hp_pad % d == 0]
    fitting = [d for d in cands if d * per_row_bytes + resident8_bytes <= budget_bytes]
    # TODO(synk): for very large num_classes the resident accumulators alone may exceed the
    # budget (needs class-chunk grid axis); fall back to the minimal 8-row tile in that case.
    th = max(fitting) if fitting else 8
    return hp_pad, th, 8


def focal_dice_loss(x_nchw, target, *, gamma=2, ignore_index=-100, smooth=1e-6,
                    tile_h=None):
    """x_nchw: (B, C, H, W) float logits (f32 or bf16); target: (B, H, W) int class indices."""
    B, C, H, W = x_nchw.shape
    assert target.shape == (B, H, W)
    tgt = target.astype(jnp.int32)

    # ---- lane packing: fold k image rows into the lane axis when W is narrow ----
    k = 1
    if W < 128 and (128 % W == 0):
        kt = 128 // W
        if H % kt == 0:
            k = kt
    Wp = W * k
    Hp = H // k
    x_r = x_nchw.reshape(B, C, Hp, Wp)      # contiguous NCHW -> pure metadata reshape
    tgt_r = tgt.reshape(B, Hp, Wp)

    itemsize = jnp.dtype(x_nchw.dtype).itemsize
    budget, vmem_limit = _vmem_budgets()
    # Per-row VMEM: double-buffered logits + target blocks plus ~12 live f32 (·, Wp) temps.
    per_row = Wp * (2 * C * itemsize + 2 * 4 + 12 * 4)
    # Resident accumulator output blocks (focal/count/inter/card), incl. double buffering.
    resident8 = 2 * (2 * C + 2) * 8 * Wp * 4

    if tile_h is None:
        hp_pad, th, acc_rows = _choose_tile(Hp, per_row, resident8, budget)
    else:
        assert Hp % tile_h == 0, "tile_h must divide the (packed) height"
        hp_pad, th = Hp, tile_h
        acc_rows = 8 if tile_h % 8 == 0 else tile_h

    needs_pad = hp_pad > Hp
    if needs_pad:
        x_r = jnp.pad(x_r, ((0, 0), (0, 0), (0, hp_pad - Hp), (0, 0)))
        tgt_r = jnp.pad(tgt_r, ((0, 0), (0, hp_pad - Hp), (0, 0)), constant_values=-1)

    steps = hp_pad // th
    # Second parallel axis so both v7x TensorCores are busy even when B == 1.
    n_chunks = 2 if (B == 1 and steps % 2 == 0 and steps >= 2) else 1
    spc = steps // n_chunks
    grid = (B, n_chunks, spc)

    kernel = functools.partial(
        _focal_dice_kernel, num_classes=C, tile_h=th, acc_rows=acc_rows, gamma=gamma,
        ignore_index=ignore_index, steps_per_chunk=spc, hp_valid=Hp,
        needs_pad_mask=needs_pad)

    BC = B * n_chunks
    out_shape = (
        jax.ShapeDtypeStruct((BC, acc_rows, Wp), jnp.float32),      # focal partial sums
        jax.ShapeDtypeStruct((BC, acc_rows, Wp), jnp.float32),      # valid-pixel counts
        jax.ShapeDtypeStruct((BC, C, acc_rows, Wp), jnp.float32),   # dice intersection partials
        jax.ShapeDtypeStruct((BC, C, acc_rows, Wp), jnp.float32),   # dice cardinality partials
    )

    focal_p, count_p, inter_p, card_p = pl.pallas_call(
        kernel,
        out_shape=out_shape,
        grid_spec=pltpu.PrefetchScalarGridSpec(
            num_scalar_prefetch=0,
            grid=grid,
            in_specs=[
                # logits fed directly from NCHW: no standalone XLA transpose pass
                pl.BlockSpec((1, C, th, Wp), lambda b, ch, h: (b, 0, ch * spc + h, 0)),
                pl.BlockSpec((1, th, Wp), lambda b, ch, h: (b, ch * spc + h, 0)),
            ],
            out_specs=[
                pl.BlockSpec((1, acc_rows, Wp),
                             lambda b, ch, h: (b * n_chunks + ch, 0, 0)),
                pl.BlockSpec((1, acc_rows, Wp),
                             lambda b, ch, h: (b * n_chunks + ch, 0, 0)),
                pl.BlockSpec((1, C, acc_rows, Wp),
                             lambda b, ch, h: (b * n_chunks + ch, 0, 0, 0)),
                pl.BlockSpec((1, C, acc_rows, Wp),
                             lambda b, ch, h: (b * n_chunks + ch, 0, 0, 0)),
            ],
        ),
        compiler_params=pltpu.CompilerParams(
            dimension_semantics=("parallel", "parallel", "arbitrary"),
            vmem_limit_bytes=vmem_limit,
        ),
    )(x_r, tgt_r)

    # Tiny epilogue (O(B*C*Wp)) in plain JAX: combine per-batch / per-chunk partials.
    count = jnp.sum(count_p)
    # NOTE: if every target equals ignore_index, count == 0 and focal is NaN — matches
    # F.nll_loss(..., reduction='mean') with no valid targets.
    focal = jnp.sum(focal_p) / count
    inter = jnp.sum(inter_p, axis=(0, 2))                    # (C, Wp)
    card = jnp.sum(card_p, axis=(0, 2))                      # (C, Wp)
    if k > 1:
        inter = inter.reshape(C, k, W).sum(axis=1)           # undo lane packing -> (C, W)
        card = card.reshape(C, k, W).sum(axis=1)
    dice_coef = jnp.mean(2.0 * inter / (card + smooth))
    return focal - jnp.log(dice_coef)


if __name__ == "__main__":
    key = jax.random.PRNGKey(0)
    B, C, H, W = 2, 4, 16, 16
    kx, kt = jax.random.split(key)
    x = jax.random.normal(kx, (B, C, H, W), dtype=jnp.float32)
    tgt = jax.random.randint(kt, (B, H, W), 0, C, dtype=jnp.int32)

    # module defaults: gamma=2, weight=None, ignore_index=-100, loss='multi'
    loss = jax.block_until_ready(focal_dice_loss(x, tgt, gamma=2))

    # pure-JAX reference of the PyTorch forward
    logp = jax.nn.log_softmax(x, axis=1)
    p = jnp.exp(logp)
    logpt = jnp.take_along_axis(logp, tgt[:, None], axis=1)[:, 0]
    pt = jnp.exp(logpt)
    focal_ref = jnp.mean(-((1.0 - pt) ** 2) * logpt)
    oh = jax.nn.one_hot(tgt, C, dtype=jnp.float32).transpose(0, 3, 1, 2)
    inter = jnp.sum(p * oh, axis=(0, 2))
    card = jnp.sum(p + oh, axis=(0, 2))
    dice_coef = jnp.mean(2.0 * inter / (card + 1e-6))
    ref = focal_ref - jnp.log(dice_coef)

    assert jnp.allclose(loss, ref, rtol=1e-5, atol=1e-5), (float(loss), float(ref))
    print("KERNEL_OK")
</pallas_src>

<mosaic_0001>
module attributes {stable_mosaic.version = 11 : i64} {
  func.func @_focal_dice_kernel(%arg0: i32, %arg1: i32, %arg2: i32, %arg3: memref<1x4x2x128xf32, #tpu.memory_space<vmem>>, %arg4: memref<1x2x128xi32, #tpu.memory_space<vmem>>, %arg5: memref<1x2x128xf32, #tpu.memory_space<vmem>>, %arg6: memref<1x2x128xf32, #tpu.memory_space<vmem>>, %arg7: memref<1x4x2x128xf32, #tpu.memory_space<vmem>>, %arg8: memref<1x4x2x128xf32, #tpu.memory_space<vmem>>) attributes {dimension_semantics = [#tpu.dimension_semantics<parallel>, #tpu.dimension_semantics<parallel>, #tpu.dimension_semantics<arbitrary>], iteration_bounds = array<i64: 2, 1, 1>, scalar_prefetch = 0 : i64, scratch_operands = 0 : i64, tpu.core_type = #tpu.core_type<tc>, window_params = [{transform_indices = @transform_0, window_bounds = array<i64: 1, 4, 2, 128>}, {transform_indices = @transform_1, window_bounds = array<i64: 1, 2, 128>}, {transform_indices = @transform_2, window_bounds = array<i64: 1, 2, 128>}, {transform_indices = @transform_3, window_bounds = array<i64: 1, 2, 128>}, {transform_indices = @transform_4, window_bounds = array<i64: 1, 4, 2, 128>}, {transform_indices = @transform_5, window_bounds = array<i64: 1, 4, 2, 128>}]} {
    %c0_i32 = arith.constant 0 : i32
    %0 = arith.cmpi eq, %arg2, %c0_i32 : i32
    %1 = arith.extui %0 : i1 to i32
    %c0_i32_0 = arith.constant 0 : i32
    %2 = arith.cmpi ne, %1, %c0_i32_0 : i32
    scf.if %2 {
      %cst_137 = arith.constant 0.000000e+00 : f32
      %178 = vector.broadcast %cst_137 : f32 to vector<1x2x128xf32>
      %c0_138 = arith.constant 0 : index
      %c0_139 = arith.constant 0 : index
      %c0_140 = arith.constant 0 : index
      %179 = vector.load %arg5[%c0_138, %c0_139, %c0_140] : memref<1x2x128xf32, #tpu.memory_space<vmem>>, vector<1x2x128xf32>
      tpu.vector_store %arg5[%c0_138, %c0_139, %c0_140], %178 {strides = array<i32>} : memref<1x2x128xf32, #tpu.memory_space<vmem>>, vector<1x2x128xf32>,
      %cst_141 = arith.constant 0.000000e+00 : f32
      %180 = vector.broadcast %cst_141 : f32 to vector<1x2x128xf32>
      %c0_142 = arith.constant 0 : index
      %c0_143 = arith.constant 0 : index
      %c0_144 = arith.constant 0 : index
      %181 = vector.load %arg6[%c0_142, %c0_143, %c0_144] : memref<1x2x128xf32, #tpu.memory_space<vmem>>, vector<1x2x128xf32>
      tpu.vector_store %arg6[%c0_142, %c0_143, %c0_144], %180 {strides = array<i32>} : memref<1x2x128xf32, #tpu.memory_space<vmem>>, vector<1x2x128xf32>,
      %cst_145 = arith.constant 0.000000e+00 : f32
      %182 = vector.broadcast %cst_145 : f32 to vector<1x4x2x128xf32>
      %c0_146 = arith.constant 0 : index
      %c0_147 = arith.constant 0 : index
      %c0_148 = arith.constant 0 : index
      %c0_149 = arith.constant 0 : index
      %183 = vector.load %arg7[%c0_146, %c0_147, %c0_148, %c0_149] : memref<1x4x2x128xf32, #tpu.memory_space<vmem>>, vector<1x4x2x128xf32>
      tpu.vector_store %arg7[%c0_146, %c0_147, %c0_148, %c0_149], %182 {strides = array<i32>} : memref<1x4x2x128xf32, #tpu.memory_space<vmem>>, vector<1x4x2x128xf32>,
      %cst_150 = arith.constant 0.000000e+00 : f32
      %184 = vector.broadcast %cst_150 : f32 to vector<1x4x2x128xf32>
      %c0_151 = arith.constant 0 : index
      %c0_152 = arith.constant 0 : index
      %c0_153 = arith.constant 0 : index
      %c0_154 = arith.constant 0 : index
      %185 = vector.load %arg8[%c0_151, %c0_152, %c0_153, %c0_154] : memref<1x4x2x128xf32, #tpu.memory_space<vmem>>, vector<1x4x2x128xf32>
      tpu.vector_store %arg8[%c0_151, %c0_152, %c0_153, %c0_154], %184 {strides = array<i32>} : memref<1x4x2x128xf32, #tpu.memory_space<vmem>>, vector<1x4x2x128xf32>,
    } else {
    }
    %c0 = arith.constant 0 : index
    %c0_1 = arith.constant 0 : index
    %c0_2 = arith.constant 0 : index
    %3 = vector.load %arg4[%c0, %c0_1, %c0_2] : memref<1x2x128xi32, #tpu.memory_space<vmem>>, vector<1x2x128xi32>
    %4 = vector.shape_cast %3 : vector<1x2x128xi32> to vector<2x128xi32>
    %c0_3 = arith.constant 0 : index
    %c0_4 = arith.constant 0 : index
    %c0_5 = arith.constant 0 : index
    %c0_6 = arith.constant 0 : index
    %5 = vector.load %arg3[%c0_3, %c0_4, %c0_5, %c0_6] : memref<1x4x2x128xf32, #tpu.memory_space<vmem>>, vector<1x1x2x128xf32>
    %6 = vector.shape_cast %5 : vector<1x1x2x128xf32> to vector<2x128xf32>
    %c0_7 = arith.constant 0 : index
    %c1 = arith.constant 1 : index
    %c0_8 = arith.constant 0 : index
    %c0_9 = arith.constant 0 : index
    %7 = vector.load %arg3[%c0_7, %c1, %c0_8, %c0_9] : memref<1x4x2x128xf32, #tpu.memory_space<vmem>>, vector<1x1x2x128xf32>
    %8 = vector.shape_cast %7 : vector<1x1x2x128xf32> to vector<2x128xf32>
    %9 = arith.maximumf %6, %8 : vector<2x128xf32>
    %c0_10 = arith.constant 0 : index
    %c2 = arith.constant 2 : index
    %c0_11 = arith.constant 0 : index
    %c0_12 = arith.constant 0 : index
    %10 = vector.load %arg3[%c0_10, %c2, %c0_11, %c0_12] : memref<1x4x2x128xf32, #tpu.memory_space<vmem>>, vector<1x1x2x128xf32>
    %11 = vector.shape_cast %10 : vector<1x1x2x128xf32> to vector<2x128xf32>
    %12 = arith.maximumf %9, %11 : vector<2x128xf32>
    %c0_13 = arith.constant 0 : index
    %c3 = arith.constant 3 : index
    %c0_14 = arith.constant 0 : index
    %c0_15 = arith.constant 0 : index
    %13 = vector.load %arg3[%c0_13, %c3, %c0_14, %c0_15] : memref<1x4x2x128xf32, #tpu.memory_space<vmem>>, vector<1x1x2x128xf32>
    %14 = vector.shape_cast %13 : vector<1x1x2x128xf32> to vector<2x128xf32>
    %15 = arith.maximumf %12, %14 : vector<2x128xf32>
    %cst = arith.constant 0.000000e+00 : f32
    %16 = vector.broadcast %cst : f32 to vector<2x128xf32>
    %cst_16 = arith.constant 0.000000e+00 : f32
    %17 = vector.broadcast %cst_16 : f32 to vector<2x128xf32>
    %c0_17 = arith.constant 0 : index
    %c0_18 = arith.constant 0 : index
    %c0_19 = arith.constant 0 : index
    %c0_20 = arith.constant 0 : index
    %18 = vector.load %arg3[%c0_17, %c0_18, %c0_19, %c0_20] : memref<1x4x2x128xf32, #tpu.memory_space<vmem>>, vector<1x1x2x128xf32>
    %19 = vector.shape_cast %18 : vector<1x1x2x128xf32> to vector<2x128xf32>
    %20 = arith.subf %19, %15 : vector<2x128xf32>
    %21 = math.exp %20 : vector<2x128xf32>
    %22 = arith.addf %16, %21 : vector<2x128xf32>
    %c0_i32_21 = arith.constant 0 : i32
    %23 = vector.broadcast %c0_i32_21 : i32 to vector<2x128xi32>
    %24 = arith.cmpi eq, %4, %23 : vector<2x128xi32>
    %25 = arith.select %24, %20, %17 : vector<2x128xi1>, vector<2x128xf32>
    %c0_22 = arith.constant 0 : index
    %c1_23 = arith.constant 1 : index
    %c0_24 = arith.constant 0 : index
    %c0_25 = arith.constant 0 : index
    %26 = vector.load %arg3[%c0_22, %c1_23, %c0_24, %c0_25] : memref<1x4x2x128xf32, #tpu.memory_space<vmem>>, vector<1x1x2x128xf32>
    %27 = vector.shape_cast %26 : vector<1x1x2x128xf32> to vector<2x128xf32>
    %28 = arith.subf %27, %15 : vector<2x128xf32>
    %29 = math.exp %28 : vector<2x128xf32>
    %30 = arith.addf %22, %29 : vector<2x128xf32>
    %c1_i32 = arith.constant 1 : i32
    %31 = vector.broadcast %c1_i32 : i32 to vector<2x128xi32>
    %32 = arith.cmpi eq, %4, %31 : vector<2x128xi32>
    %33 = arith.select %32, %28, %25 : vector<2x128xi1>, vector<2x128xf32>
    %c0_26 = arith.constant 0 : index
    %c2_27 = arith.constant 2 : index
    %c0_28 = arith.constant 0 : index
    %c0_29 = arith.constant 0 : index
    %34 = vector.load %arg3[%c0_26, %c2_27, %c0_28, %c0_29] : memref<1x4x2x128xf32, #tpu.memory_space<vmem>>, vector<1x1x2x128xf32>
    %35 = vector.shape_cast %34 : vector<1x1x2x128xf32> to vector<2x128xf32>
    %36 = arith.subf %35, %15 : vector<2x128xf32>
    %37 = math.exp %36 : vector<2x128xf32>
    %38 = arith.addf %30, %37 : vector<2x128xf32>
    %c2_i32 = arith.constant 2 : i32
    %39 = vector.broadcast %c2_i32 : i32 to vector<2x128xi32>
    %40 = arith.cmpi eq, %4, %39 : vector<2x128xi32>
    %41 = arith.select %40, %36, %33 : vector<2x128xi1>, vector<2x128xf32>
    %c0_30 = arith.constant 0 : index
    %c3_31 = arith.constant 3 : index
    %c0_32 = arith.constant 0 : index
    %c0_33 = arith.constant 0 : index
    %42 = vector.load %arg3[%c0_30, %c3_31, %c0_32, %c0_33] : memref<1x4x2x128xf32, #tpu.memory_space<vmem>>, vector<1x1x2x128xf32>
    %43 = vector.shape_cast %42 : vector<1x1x2x128xf32> to vector<2x128xf32>
    %44 = arith.subf %43, %15 : vector<2x128xf32>
    %45 = math.exp %44 : vector<2x128xf32>
    %46 = arith.addf %38, %45 : vector<2x128xf32>
    %c3_i32 = arith.constant 3 : i32
    %47 = vector.broadcast %c3_i32 : i32 to vector<2x128xi32>
    %48 = arith.cmpi eq, %4, %47 : vector<2x128xi32>
    %49 = arith.select %48, %44, %41 : vector<2x128xi1>, vector<2x128xf32>
    %50 = tpu.reciprocal %46 {approx = true} : vector<2x128xf32> -> vector<2x128xf32>
    %51 = arith.mulf %46, %50 : vector<2x128xf32>
    %cst_34 = arith.constant 2.000000e+00 : f32
    %52 = vector.broadcast %cst_34 : f32 to vector<2x128xf32>
    %53 = arith.subf %52, %51 : vector<2x128xf32>
    %54 = arith.mulf %50, %53 : vector<2x128xf32>
    %55 = math.log %46 : vector<2x128xf32>
    %c-100_i32 = arith.constant -100 : i32
    %56 = vector.broadcast %c-100_i32 : i32 to vector<2x128xi32>
    %57 = arith.cmpi ne, %4, %56 : vector<2x128xi32>
    %58 = arith.subf %49, %55 : vector<2x128xf32>
    %59 = math.exp %49 : vector<2x128xf32>
    %60 = arith.mulf %59, %54 : vector<2x128xf32>
    %61 = arith.extui %57 : vector<2x128xi1> to vector<2x128xi32>
    %62 = arith.sitofp %61 : vector<2x128xi32> to vector<2x128xf32>
    %c0_35 = arith.constant 0 : index
    %c0_36 = arith.constant 0 : index
    %c0_37 = arith.constant 0 : index
    %c0_38 = arith.constant 0 : index
    %63 = vector.load %arg3[%c0_35, %c0_36, %c0_37, %c0_38] : memref<1x4x2x128xf32, #tpu.memory_space<vmem>>, vector<1x1x2x128xf32>
    %64 = vector.shape_cast %63 : vector<1x1x2x128xf32> to vector<2x128xf32>
    %65 = arith.subf %64, %15 : vector<2x128xf32>
    %66 = math.exp %65 : vector<2x128xf32>
    %67 = arith.mulf %66, %54 : vector<2x128xf32>
    %c0_i32_39 = arith.constant 0 : i32
    %68 = vector.broadcast %c0_i32_39 : i32 to vector<2x128xi32>
    %69 = arith.cmpi eq, %4, %68 : vector<2x128xi32>
    %c0_40 = arith.constant 0 : index
    %c0_41 = arith.constant 0 : index
    %c0_42 = arith.constant 0 : index
    %c0_43 = arith.constant 0 : index
    %70 = vector.load %arg7[%c0_40, %c0_41, %c0_42, %c0_43] : memref<1x4x2x128xf32, #tpu.memory_space<vmem>>, vector<1x1x2x128xf32>
    %71 = vector.shape_cast %70 : vector<1x1x2x128xf32> to vector<2x128xf32>
    %cst_44 = arith.constant 0.000000e+00 : f32
    %72 = vector.broadcast %cst_44 : f32 to vector<2x128xf32>
    %73 = arith.select %69, %60, %72 : vector<2x128xi1>, vector<2x128xf32>
    %74 = arith.addf %71, %73 : vector<2x128xf32>
    %c0_45 = arith.constant 0 : index
    %c0_46 = arith.constant 0 : index
    %c0_47 = arith.constant 0 : index
    %c0_48 = arith.constant 0 : index
    %75 = vector.load %arg7[%c0_45, %c0_46, %c0_47, %c0_48] : memref<1x4x2x128xf32, #tpu.memory_space<vmem>>, vector<1x1x2x128xf32>
    %76 = vector.shape_cast %75 : vector<1x1x2x128xf32> to vector<2x128xf32>
    %77 = vector.shape_cast %74 : vector<2x128xf32> to vector<1x1x2x128xf32>
    tpu.vector_store %arg7[%c0_45, %c0_46, %c0_47, %c0_48], %77 {strides = array<i32>} : memref<1x4x2x128xf32, #tpu.memory_space<vmem>>, vector<1x1x2x128xf32>,
    %c0_49 = arith.constant 0 : index
    %c0_50 = arith.constant 0 : index
    %c0_51 = arith.constant 0 : index
    %c0_52 = arith.constant 0 : index
    %78 = vector.load %arg8[%c0_49, %c0_50, %c0_51, %c0_52] : memref<1x4x2x128xf32, #tpu.memory_space<vmem>>, vector<1x1x2x128xf32>
    %79 = vector.shape_cast %78 : vector<1x1x2x128xf32> to vector<2x128xf32>
    %80 = arith.extui %69 : vector<2x128xi1> to vector<2x128xi32>
    %81 = arith.sitofp %80 : vector<2x128xi32> to vector<2x128xf32>
    %82 = arith.addf %67, %81 : vector<2x128xf32>
    %83 = arith.addf %79, %82 : vector<2x128xf32>
    %c0_53 = arith.constant 0 : index
    %c0_54 = arith.constant 0 : index
    %c0_55 = arith.constant 0 : index
    %c0_56 = arith.constant 0 : index
    %84 = vector.load %arg8[%c0_53, %c0_54, %c0_55, %c0_56] : memref<1x4x2x128xf32, #tpu.memory_space<vmem>>, vector<1x1x2x128xf32>
    %85 = vector.shape_cast %84 : vector<1x1x2x128xf32> to vector<2x128xf32>
    %86 = vector.shape_cast %83 : vector<2x128xf32> to vector<1x1x2x128xf32>
    tpu.vector_store %arg8[%c0_53, %c0_54, %c0_55, %c0_56], %86 {strides = array<i32>} : memref<1x4x2x128xf32, #tpu.memory_space<vmem>>, vector<1x1x2x128xf32>,
    %c0_57 = arith.constant 0 : index
    %c1_58 = arith.constant 1 : index
    %c0_59 = arith.constant 0 : index
    %c0_60 = arith.constant 0 : index
    %87 = vector.load %arg3[%c0_57, %c1_58, %c0_59, %c0_60] : memref<1x4x2x128xf32, #tpu.memory_space<vmem>>, vector<1x1x2x128xf32>
    %88 = vector.shape_cast %87 : vector<1x1x2x128xf32> to vector<2x128xf32>
    %89 = arith.subf %88, %15 : vector<2x128xf32>
    %90 = math.exp %89 : vector<2x128xf32>
    %91 = arith.mulf %90, %54 : vector<2x128xf32>
    %c1_i32_61 = arith.constant 1 : i32
    %92 = vector.broadcast %c1_i32_61 : i32 to vector<2x128xi32>
    %93 = arith.cmpi eq, %4, %92 : vector<2x128xi32>
    %c0_62 = arith.constant 0 : index
    %c1_63 = arith.constant 1 : index
    %c0_64 = arith.constant 0 : index
    %c0_65 = arith.constant 0 : index
    %94 = vector.load %arg7[%c0_62, %c1_63, %c0_64, %c0_65] : memref<1x4x2x128xf32, #tpu.memory_space<vmem>>, vector<1x1x2x128xf32>
    %95 = vector.shape_cast %94 : vector<1x1x2x128xf32> to vector<2x128xf32>
    %cst_66 = arith.constant 0.000000e+00 : f32
    %96 = vector.broadcast %cst_66 : f32 to vector<2x128xf32>
    %97 = arith.select %93, %60, %96 : vector<2x128xi1>, vector<2x128xf32>
    %98 = arith.addf %95, %97 : vector<2x128xf32>
    %c0_67 = arith.constant 0 : index
    %c1_68 = arith.constant 1 : index
    %c0_69 = arith.constant 0 : index
    %c0_70 = arith.constant 0 : index
    %99 = vector.load %arg7[%c0_67, %c1_68, %c0_69, %c0_70] : memref<1x4x2x128xf32, #tpu.memory_space<vmem>>, vector<1x1x2x128xf32>
    %100 = vector.shape_cast %99 : vector<1x1x2x128xf32> to vector<2x128xf32>
    %101 = vector.shape_cast %98 : vector<2x128xf32> to vector<1x1x2x128xf32>
    tpu.vector_store %arg7[%c0_67, %c1_68, %c0_69, %c0_70], %101 {strides = array<i32>} : memref<1x4x2x128xf32, #tpu.memory_space<vmem>>, vector<1x1x2x128xf32>,
    %c0_71 = arith.constant 0 : index
    %c1_72 = arith.constant 1 : index
    %c0_73 = arith.constant 0 : index
    %c0_74 = arith.constant 0 : index
    %102 = vector.load %arg8[%c0_71, %c1_72, %c0_73, %c0_74] : memref<1x4x2x128xf32, #tpu.memory_space<vmem>>, vector<1x1x2x128xf32>
    %103 = vector.shape_cast %102 : vector<1x1x2x128xf32> to vector<2x128xf32>
    %104 = arith.extui %93 : vector<2x128xi1> to vector<2x128xi32>
    %105 = arith.sitofp %104 : vector<2x128xi32> to vector<2x128xf32>
    %106 = arith.addf %91, %105 : vector<2x128xf32>
    %107 = arith.addf %103, %106 : vector<2x128xf32>
    %c0_75 = arith.constant 0 : index
    %c1_76 = arith.constant 1 : index
    %c0_77 = arith.constant 0 : index
    %c0_78 = arith.constant 0 : index
    %108 = vector.load %arg8[%c0_75, %c1_76, %c0_77, %c0_78] : memref<1x4x2x128xf32, #tpu.memory_space<vmem>>, vector<1x1x2x128xf32>
    %109 = vector.shape_cast %108 : vector<1x1x2x128xf32> to vector<2x128xf32>
    %110 = vector.shape_cast %107 : vector<2x128xf32> to vector<1x1x2x128xf32>
    tpu.vector_store %arg8[%c0_75, %c1_76, %c0_77, %c0_78], %110 {strides = array<i32>} : memref<1x4x2x128xf32, #tpu.memory_space<vmem>>, vector<1x1x2x128xf32>,
    %c0_79 = arith.constant 0 : index
    %c2_80 = arith.constant 2 : index
    %c0_81 = arith.constant 0 : index
    %c0_82 = arith.constant 0 : index
    %111 = vector.load %arg3[%c0_79, %c2_80, %c0_81, %c0_82] : memref<1x4x2x128xf32, #tpu.memory_space<vmem>>, vector<1x1x2x128xf32>
    %112 = vector.shape_cast %111 : vector<1x1x2x128xf32> to vector<2x128xf32>
    %113 = arith.subf %112, %15 : vector<2x128xf32>
    %114 = math.exp %113 : vector<2x128xf32>
    %115 = arith.mulf %114, %54 : vector<2x128xf32>
    %c2_i32_83 = arith.constant 2 : i32
    %116 = vector.broadcast %c2_i32_83 : i32 to vector<2x128xi32>
    %117 = arith.cmpi eq, %4, %116 : vector<2x128xi32>
    %c0_84 = arith.constant 0 : index
    %c2_85 = arith.constant 2 : index
    %c0_86 = arith.constant 0 : index
    %c0_87 = arith.constant 0 : index
    %118 = vector.load %arg7[%c0_84, %c2_85, %c0_86, %c0_87] : memref<1x4x2x128xf32, #tpu.memory_space<vmem>>, vector<1x1x2x128xf32>
    %119 = vector.shape_cast %118 : vector<1x1x2x128xf32> to vector<2x128xf32>
    %cst_88 = arith.constant 0.000000e+00 : f32
    %120 = vector.broadcast %cst_88 : f32 to vector<2x128xf32>
    %121 = arith.select %117, %60, %120 : vector<2x128xi1>, vector<2x128xf32>
    %122 = arith.addf %119, %121 : vector<2x128xf32>
    %c0_89 = arith.constant 0 : index
    %c2_90 = arith.constant 2 : index
    %c0_91 = arith.constant 0 : index
    %c0_92 = arith.constant 0 : index
    %123 = vector.load %arg7[%c0_89, %c2_90, %c0_91, %c0_92] : memref<1x4x2x128xf32, #tpu.memory_space<vmem>>, vector<1x1x2x128xf32>
    %124 = vector.shape_cast %123 : vector<1x1x2x128xf32> to vector<2x128xf32>
    %125 = vector.shape_cast %122 : vector<2x128xf32> to vector<1x1x2x128xf32>
    tpu.vector_store %arg7[%c0_89, %c2_90, %c0_91, %c0_92], %125 {strides = array<i32>} : memref<1x4x2x128xf32, #tpu.memory_space<vmem>>, vector<1x1x2x128xf32>,
    %c0_93 = arith.constant 0 : index
    %c2_94 = arith.constant 2 : index
    %c0_95 = arith.constant 0 : index
    %c0_96 = arith.constant 0 : index
    %126 = vector.load %arg8[%c0_93, %c2_94, %c0_95, %c0_96] : memref<1x4x2x128xf32, #tpu.memory_space<vmem>>, vector<1x1x2x128xf32>
    %127 = vector.shape_cast %126 : vector<1x1x2x128xf32> to vector<2x128xf32>
    %128 = arith.extui %117 : vector<2x128xi1> to vector<2x128xi32>
    %129 = arith.sitofp %128 : vector<2x128xi32> to vector<2x128xf32>
    %130 = arith.addf %115, %129 : vector<2x128xf32>
    %131 = arith.addf %127, %130 : vector<2x128xf32>
    %c0_97 = arith.constant 0 : index
    %c2_98 = arith.constant 2 : index
    %c0_99 = arith.constant 0 : index
    %c0_100 = arith.constant 0 : index
    %132 = vector.load %arg8[%c0_97, %c2_98, %c0_99, %c0_100] : memref<1x4x2x128xf32, #tpu.memory_space<vmem>>, vector<1x1x2x128xf32>
    %133 = vector.shape_cast %132 : vector<1x1x2x128xf32> to vector<2x128xf32>
    %134 = vector.shape_cast %131 : vector<2x128xf32> to vector<1x1x2x128xf32>
    tpu.vector_store %arg8[%c0_97, %c2_98, %c0_99, %c0_100], %134 {strides = array<i32>} : memref<1x4x2x128xf32, #tpu.memory_space<vmem>>, vector<1x1x2x128xf32>,
    %c0_101 = arith.constant 0 : index
    %c3_102 = arith.constant 3 : index
    %c0_103 = arith.constant 0 : index
    %c0_104 = arith.constant 0 : index
    %135 = vector.load %arg3[%c0_101, %c3_102, %c0_103, %c0_104] : memref<1x4x2x128xf32, #tpu.memory_space<vmem>>, vector<1x1x2x128xf32>
    %136 = vector.shape_cast %135 : vector<1x1x2x128xf32> to vector<2x128xf32>
    %137 = arith.subf %136, %15 : vector<2x128xf32>
    %138 = math.exp %137 : vector<2x128xf32>
    %139 = arith.mulf %138, %54 : vector<2x128xf32>
    %c3_i32_105 = arith.constant 3 : i32
    %140 = vector.broadcast %c3_i32_105 : i32 to vector<2x128xi32>
    %141 = arith.cmpi eq, %4, %140 : vector<2x128xi32>
    %c0_106 = arith.constant 0 : index
    %c3_107 = arith.constant 3 : index
    %c0_108 = arith.constant 0 : index
    %c0_109 = arith.constant 0 : index
    %142 = vector.load %arg7[%c0_106, %c3_107, %c0_108, %c0_109] : memref<1x4x2x128xf32, #tpu.memory_space<vmem>>, vector<1x1x2x128xf32>
    %143 = vector.shape_cast %142 : vector<1x1x2x128xf32> to vector<2x128xf32>
    %cst_110 = arith.constant 0.000000e+00 : f32
    %144 = vector.broadcast %cst_110 : f32 to vector<2x128xf32>
    %145 = arith.select %141, %60, %144 : vector<2x128xi1>, vector<2x128xf32>
    %146 = arith.addf %143, %145 : vector<2x128xf32>
    %c0_111 = arith.constant 0 : index
    %c3_112 = arith.constant 3 : index
    %c0_113 = arith.constant 0 : index
    %c0_114 = arith.constant 0 : index
    %147 = vector.load %arg7[%c0_111, %c3_112, %c0_113, %c0_114] : memref<1x4x2x128xf32, #tpu.memory_space<vmem>>, vector<1x1x2x128xf32>
    %148 = vector.shape_cast %147 : vector<1x1x2x128xf32> to vector<2x128xf32>
    %149 = vector.shape_cast %146 : vector<2x128xf32> to vector<1x1x2x128xf32>
    tpu.vector_store %arg7[%c0_111, %c3_112, %c0_113, %c0_114], %149 {strides = array<i32>} : memref<1x4x2x128xf32, #tpu.memory_space<vmem>>, vector<1x1x2x128xf32>,
    %c0_115 = arith.constant 0 : index
    %c3_116 = arith.constant 3 : index
    %c0_117 = arith.constant 0 : index
    %c0_118 = arith.constant 0 : index
    %150 = vector.load %arg8[%c0_115, %c3_116, %c0_117, %c0_118] : memref<1x4x2x128xf32, #tpu.memory_space<vmem>>, vector<1x1x2x128xf32>
    %151 = vector.shape_cast %150 : vector<1x1x2x128xf32> to vector<2x128xf32>
    %152 = arith.extui %141 : vector<2x128xi1> to vector<2x128xi32>
    %153 = arith.sitofp %152 : vector<2x128xi32> to vector<2x128xf32>
    %154 = arith.addf %139, %153 : vector<2x128xf32>
    %155 = arith.addf %151, %154 : vector<2x128xf32>
    %c0_119 = arith.constant 0 : index
    %c3_120 = arith.constant 3 : index
    %c0_121 = arith.constant 0 : index
    %c0_122 = arith.constant 0 : index
    %156 = vector.load %arg8[%c0_119, %c3_120, %c0_121, %c0_122] : memref<1x4x2x128xf32, #tpu.memory_space<vmem>>, vector<1x1x2x128xf32>
    %157 = vector.shape_cast %156 : vector<1x1x2x128xf32> to vector<2x128xf32>
    %158 = vector.shape_cast %155 : vector<2x128xf32> to vector<1x1x2x128xf32>
    tpu.vector_store %arg8[%c0_119, %c3_120, %c0_121, %c0_122], %158 {strides = array<i32>} : memref<1x4x2x128xf32, #tpu.memory_space<vmem>>, vector<1x1x2x128xf32>,
    %cst_123 = arith.constant 1.000000e+00 : f32
    %159 = vector.broadcast %cst_123 : f32 to vector<2x128xf32>
    %160 = arith.subf %159, %60 : vector<2x128xf32>
    %161 = arith.mulf %160, %160 : vector<2x128xf32>
    %162 = arith.mulf %161, %58 : vector<2x128xf32>
    %cst_124 = arith.constant 0.000000e+00 : f32
    %163 = vector.broadcast %cst_124 : f32 to vector<2x128xf32>
    %164 = arith.subf %163, %162 : vector<2x128xf32>
    %165 = arith.mulf %164, %62 : vector<2x128xf32>
    %c0_125 = arith.constant 0 : index
    %c0_126 = arith.constant 0 : index
    %c0_127 = arith.constant 0 : index
    %166 = vector.load %arg5[%c0_125, %c0_126, %c0_127] : memref<1x2x128xf32, #tpu.memory_space<vmem>>, vector<1x2x128xf32>
    %167 = vector.shape_cast %166 : vector<1x2x128xf32> to vector<2x128xf32>
    %168 = arith.addf %167, %165 : vector<2x128xf32>
    %c0_128 = arith.constant 0 : index
    %c0_129 = arith.constant 0 : index
    %c0_130 = arith.constant 0 : index
    %169 = vector.load %arg5[%c0_128, %c0_129, %c0_130] : memref<1x2x128xf32, #tpu.memory_space<vmem>>, vector<1x2x128xf32>
    %170 = vector.shape_cast %169 : vector<1x2x128xf32> to vector<2x128xf32>
    %171 = vector.shape_cast %168 : vector<2x128xf32> to vector<1x2x128xf32>
    tpu.vector_store %arg5[%c0_128, %c0_129, %c0_130], %171 {strides = array<i32>} : memref<1x2x128xf32, #tpu.memory_space<vmem>>, vector<1x2x128xf32>,
    %c0_131 = arith.constant 0 : index
    %c0_132 = arith.constant 0 : index
    %c0_133 = arith.constant 0 : index
    %172 = vector.load %arg6[%c0_131, %c0_132, %c0_133] : memref<1x2x128xf32, #tpu.memory_space<vmem>>, vector<1x2x128xf32>
    %173 = vector.shape_cast %172 : vector<1x2x128xf32> to vector<2x128xf32>
    %174 = arith.addf %173, %62 : vector<2x128xf32>
    %c0_134 = arith.constant 0 : index
    %c0_135 = arith.constant 0 : index
    %c0_136 = arith.constant 0 : index
    %175 = vector.load %arg6[%c0_134, %c0_135, %c0_136] : memref<1x2x128xf32, #tpu.memory_space<vmem>>, vector<1x2x128xf32>
    %176 = vector.shape_cast %175 : vector<1x2x128xf32> to vector<2x128xf32>
    %177 = vector.shape_cast %174 : vector<2x128xf32> to vector<1x2x128xf32>
    tpu.vector_store %arg6[%c0_134, %c0_135, %c0_136], %177 {strides = array<i32>} : memref<1x2x128xf32, #tpu.memory_space<vmem>>, vector<1x2x128xf32>,
    return
  }
  func.func @transform_0(%arg0: i32, %arg1: i32, %arg2: i32) -> (i32, i32, i32, i32) {
    %c1_i32 = arith.constant 1 : i32
    %0 = arith.muli %arg1, %c1_i32 : i32
    %1 = arith.addi %0, %arg2 : i32
    %c0_i32 = arith.constant 0 : i32
    %c0_i32_0 = arith.constant 0 : i32
    %c0_i32_1 = arith.constant 0 : i32
    return %arg0, %c0_i32, %1, %c0_i32_0 : i32, i32, i32, i32
  }
  func.func @transform_1(%arg0: i32, %arg1: i32, %arg2: i32) -> (i32, i32, i32) {
    %c1_i32 = arith.constant 1 : i32
    %0 = arith.muli %arg1, %c1_i32 : i32
    %1 = arith.addi %0, %arg2 : i32
    %c0_i32 = arith.constant 0 : i32
    %c0_i32_0 = arith.constant 0 : i32
    return %arg0, %1, %c0_i32 : i32, i32, i32
  }
  func.func @transform_2(%arg0: i32, %arg1: i32, %arg2: i32) -> (i32, i32, i32) {
    %c1_i32 = arith.constant 1 : i32
    %0 = arith.muli %arg0, %c1_i32 : i32
    %1 = arith.addi %0, %arg1 : i32
    %c0_i32 = arith.constant 0 : i32
    %c0_i32_0 = arith.constant 0 : i32
    %c0_i32_1 = arith.constant 0 : i32
    return %1, %c0_i32, %c0_i32_0 : i32, i32, i32
  }
  func.func @transform_3(%arg0: i32, %arg1: i32, %arg2: i32) -> (i32, i32, i32) {
    %c1_i32 = arith.constant 1 : i32
    %0 = arith.muli %arg0, %c1_i32 : i32
    %1 = arith.addi %0, %arg1 : i32
    %c0_i32 = arith.constant 0 : i32
    %c0_i32_0 = arith.constant 0 : i32
    %c0_i32_1 = arith.constant 0 : i32
    return %1, %c0_i32, %c0_i32_0 : i32, i32, i32
  }
  func.func @transform_4(%arg0: i32, %arg1: i32, %arg2: i32) -> (i32, i32, i32, i32) {
    %c1_i32 = arith.constant 1 : i32
    %0 = arith.muli %arg0, %c1_i32 : i32
    %1 = arith.addi %0, %arg1 : i32
    %c0_i32 = arith.constant 0 : i32
    %c0_i32_0 = arith.constant 0 : i32
    %c0_i32_1 = arith.constant 0 : i32
    %c0_i32_2 = arith.constant 0 : i32
    return %1, %c0_i32, %c0_i32_0, %c0_i32_1 : i32, i32, i32, i32
  }
  func.func @transform_5(%arg0: i32, %arg1: i32, %arg2: i32) -> (i32, i32, i32, i32) {
    %c1_i32 = arith.constant 1 : i32
    %0 = arith.muli %arg0, %c1_i32 : i32
    %1 = arith.addi %0, %arg1 : i32
    %c0_i32 = arith.constant 0 : i32
    %c0_i32_0 = arith.constant 0 : i32
    %c0_i32_1 = arith.constant 0 : i32
    %c0_i32_2 = arith.constant 0 : i32
    return %1, %c0_i32, %c0_i32_0, %c0_i32_1 : i32, i32, i32, i32
  }
}

</mosaic_0001>

<llo_original>
// kernel: tpu_custom_call.1
$region0: #{tpu_custom_call.1}
  #allocation0 [shape = 'u32[]', space=smem, size = 0x4, offset = 0x4, fixed_abs, tag = 'smem constant byte address 0x4 - core index']
  #allocation1 [shape = 'u32[72,128]{1,0:T(1,128)}', space=vmem, size = 0x9000, scoped, tag = 'internal scratch']
  %s0 = inlined_call_operand.hbm [shape: f32[2,4,2,128], index: 0, kind: input, shape index: {}]
  %s1 = inlined_call_operand.hbm [shape: s32[2,2,128], index: 1, kind: input, shape index: {}]
  %s2 = inlined_call_operand.hbm [shape: f32[2,2,128], index: 2, kind: output, shape index: {0}]
  %s3 = inlined_call_operand.hbm [shape: f32[2,2,128], index: 3, kind: output, shape index: {1}]
  %s4 = inlined_call_operand.hbm [shape: f32[2,4,2,128], index: 4, kind: output, shape index: {2}]
  %s5 = inlined_call_operand.hbm [shape: f32[2,4,2,128], index: 5, kind: output, shape index: {3}]
  %6 = xla_tuple %s2, %s3, %s4, %s5
  %s7 = sld [smem:[#allocation0]]
  $region77: #{tpu_custom_call.1} parent=0
    _
  %s9 = ssub.s32 1, %s7
  %s10 = scalar_select 0, %s9, %s7
  $region1: #{tpu_custom_call.1} parent=0
    #allocation2 [shape = 'u8[8192]{0}', space=vmem, size = 0x2000, scoped, tag = 'input window, operand 0']
    #allocation3 [shape = 's32[2]{0}', space=sflag, size = 0x8, scoped, tag = 'scoped memory for tpu_custom_call.1']
    #allocation4 [shape = 's32[2]{0}', space=sflag, size = 0x8, scoped, tag = 'scoped memory for tpu_custom_call.1']
    #allocation5 [shape = 'u8[2048]{0}', space=vmem, size = 0x800, scoped, tag = 'input window, operand 1']
    #allocation6 [shape = 's32[2]{0}', space=sflag, size = 0x8, scoped, tag = 'scoped memory for tpu_custom_call.1']
    #allocation7 [shape = 'u8[2048]{0}', space=vmem, size = 0x800, scoped, tag = 'output window, operand 0']
    #allocation8 [shape = 'u8[2048]{0}', space=vmem, size = 0x800, scoped, tag = 'output window, operand 1']
    #allocation9 [shape = 's32[2]{0}', space=sflag, size = 0x8, scoped, tag = 'scoped memory for tpu_custom_call.1']
    #allocation10 [shape = 'u8[8192]{0}', space=vmem, size = 0x2000, scoped, tag = 'output window, operand 2']
    #allocation11 [shape = 'u8[8192]{0}', space=vmem, size = 0x2000, scoped, tag = 'output window, operand 3']
    #allocation12 [shape = 's32[2]{0}', space=sflag, size = 0x8, scoped, tag = 'scoped memory for tpu_custom_call.1']
    %11 = vsyncpa [#allocation3], 0
    %s12 = scalar_lea.sflag [#allocation3], 1
    %13 = vsyncpa %s12, 0
    %14 = vsyncpa [#allocation6], 0
    %s15 = scalar_lea.sflag [#allocation6], 1
    %16 = vsyncpa %s15, 0
    %17 = vsyncpa [#allocation4], 0
    %s18 = scalar_lea.sflag [#allocation4], 1
    %19 = vsyncpa %s18, 0
    %20 = vsyncpa [#allocation9], 0
    %s21 = scalar_lea.sflag [#allocation9], 1
    %22 = vsyncpa %s21, 0
    %23 = vsyncpa [#allocation12], 0
    %s24 = scalar_lea.sflag [#allocation12], 1
    %25 = vsyncpa %s24, 0
    loop: start=0, step=1, limit=4
    $region2: #{tpu_custom_call.1} parent=1 // loop_pre_header
      _
    $region3: #{tpu_custom_call.1} parent=1 // loop_header
      %s27 = sphi 0, %s31
      %p28 = scmp.ge.s32.totalorder %s27, 4
      %s34 = sphi 0, %s53
      %s35 = sphi 0, %s49
      %s36 = sphi 0, %s45
      %s37 = sphi 0, %s34
      %s38 = sphi 0, %s35
      %s39 = sphi 0, %s36
      %s40 = sphi 0, %s37
      %s41 = sphi 0, %s38
      %s42 = sphi 0, %s39
      %s60 = sphi 0, %s62
      %s63 = sphi 0, %s60
      %s64 = sphi 0, %s63
      %s80 = sphi 0, %s64
      %s90 = sphi 0, %s92
      %s93 = sphi 0, %s90
      %s94 = sphi 0, %s93
      %s110 = sphi 0, %s94
      %s118 = sphi 0, %s120
      %s121 = sphi 0, %s118
      %s122 = sphi 0, %s121
      %s138 = sphi 0, %s122
      %s146 = sphi 0, %s148
      %s149 = sphi 0, %s146
      %s150 = sphi 0, %s149
      %s166 = sphi 0, %s150
      %s174 = sphi 0, %s176
      %s177 = sphi 0, %s174
      %s178 = sphi 0, %s177
      %s194 = sphi 0, %s178
      %s202 = sphi 0, %s204
      %s205 = sphi 0, %s202
      %s206 = sphi 0, %s205
      %s222 = sphi 0, %s206
    $region4: #{tpu_custom_call.1} parent=1 // loop_header_branch
      %30 = sbr.rel (%p28) target = $region8
    $region5: #{tpu_custom_call.1} parent=1 // loop_body
      %s32 = ssub.s32 %s27, 1
      %s33 = ssub.s32 %s27, 2
      %s43 = sadd.s32 1, %s36
      %p44 = scmp.ge.s32.totalorder %s43, 1
      %s45 = scalar_select %p44, 0, %s43
      %s46 = sadd.s32 1, %s35
      %s47 = scalar_select %p44, %s46, %s35
      %p48 = scmp.ge.s32.totalorder %s47, 1
      %s49 = scalar_select %p48, 0, %s47
      %s50 = sadd.s32 1, %s34
      %s51 = scalar_select %p48, %s50, %s34
      %p52 = scmp.ge.s32.totalorder %s51, 2
      %s53 = scalar_select %p52, 0, %s51
      %s54 = sadd.s32 %s35, %s36
      %s55 = sadd.s32 %s49, %s45
      %s56 = ssub.s32 %s34, %s53
      %s57 = ssub.s32 %s54, %s55
      %s58 = sor.u32 %s56, %s57
      %p59 = scmp.eq.s32.totalorder %s58, 0
      %s61 = sadd.s32 %s60, 1
      %s62 = scalar_select %p59, %s60, %s61
      %p65 = pneg %p59
      %p66 = scmp.eq.s32.totalorder %s27, 1
      %p67 = por %p65, %p66
      %p68 = scmp.ne.s32.totalorder %s60, %s63
      %p69 = scmp.eq.s32.totalorder %s27, 0
      %p70 = por %p68, %p69
      %p71 = scmp.ne.s32.totalorder %s60, %s63
      %p72 = scmp.eq.s32.totalorder %s32, 1
      %p73 = por %p71, %p72
      %p74 = scmp.ne.s32.totalorder %s63, %s64
      %p75 = scmp.eq.s32.totalorder %s32, 0
      %p76 = por %p74, %p75
      %p77 = scmp.ne.s32.totalorder %s63, %s64
      %p78 = scmp.eq.s32.totalorder %s33, 1
      %p79 = por %p77, %p78
      %p81 = scmp.ne.s32.totalorder %s64, %s80
      %p82 = scmp.eq.s32.totalorder %s33, 0
      %p83 = por %p81, %p82
      %s84 = sadd.s32 %s35, %s36
      %s85 = sadd.s32 %s49, %s45
      %s86 = ssub.s32 %s34, %s53
      %s87 = ssub.s32 %s84, %s85
      %s88 = sor.u32 %s86, %s87
      %p89 = scmp.eq.s32.totalorder %s88, 0
      %s91 = sadd.s32 %s90, 1
      %s92 = scalar_select %p89, %s90, %s91
      %p95 = pneg %p89
      %p96 = scmp.eq.s32.totalorder %s27, 1
      %p97 = por %p95, %p96
      %p98 = scmp.ne.s32.totalorder %s90, %s93
      %p99 = scmp.eq.s32.totalorder %s27, 0
      %p100 = por %p98, %p99
      %p101 = scmp.ne.s32.totalorder %s90, %s93
      %p102 = scmp.eq.s32.totalorder %s32, 1
      %p103 = por %p101, %p102
      %p104 = scmp.ne.s32.totalorder %s93, %s94
      %p105 = scmp.eq.s32.totalorder %s32, 0
      %p106 = por %p104, %p105
      %p107 = scmp.ne.s32.totalorder %s93, %s94
      %p108 = scmp.eq.s32.totalorder %s33, 1
      %p109 = por %p107, %p108
      %p111 = scmp.ne.s32.totalorder %s94, %s110
      %p112 = scmp.eq.s32.totalorder %s33, 0
      %p113 = por %p111, %p112
      %s114 = sadd.s32 %s34, %s35
      %s115 = sadd.s32 %s53, %s49
      %s116 = ssub.s32 %s114, %s115
      %p117 = scmp.eq.s32.totalorder %s116, 0
      %s119 = sadd.s32 %s118, 1
      %s120 = scalar_select %p117, %s118, %s119
      %p123 = pneg %p117
      %p124 = scmp.eq.s32.totalorder %s27, 1
      %p125 = por %p123, %p124
      %p126 = scmp.ne.s32.totalorder %s118, %s121
      %p127 = scmp.eq.s32.totalorder %s27, 0
      %p128 = por %p126, %p127
      %p129 = scmp.ne.s32.totalorder %s118, %s121
      %p130 = scmp.eq.s32.totalorder %s32, 1
      %p131 = por %p129, %p130
      %p132 = scmp.ne.s32.totalorder %s121, %s122
      %p133 = scmp.eq.s32.totalorder %s32, 0
      %p134 = por %p132, %p133
      %p135 = scmp.ne.s32.totalorder %s121, %s122
      %p136 = scmp.eq.s32.totalorder %s33, 1
      %p137 = por %p135, %p136
      %p139 = scmp.ne.s32.totalorder %s122, %s138
      %p140 = scmp.eq.s32.totalorder %s33, 0
      %p141 = por %p139, %p140
      %s142 = sadd.s32 %s34, %s35
      %s143 = sadd.s32 %s53, %s49
      %s144 = ssub.s32 %s142, %s143
      %p145 = scmp.eq.s32.totalorder %s144, 0
      %s147 = sadd.s32 %s146, 1
      %s148 = scalar_select %p145, %s146, %s147
      %p151 = pneg %p145
      %p152 = scmp.eq.s32.totalorder %s27, 1
      %p153 = por %p151, %p152
      %p154 = scmp.ne.s32.totalorder %s146, %s149
      %p155 = scmp.eq.s32.totalorder %s27, 0
      %p156 = por %p154, %p155
      %p157 = scmp.ne.s32.totalorder %s146, %s149
      %p158 = scmp.eq.s32.totalorder %s32, 1
      %p159 = por %p157, %p158
      %p160 = scmp.ne.s32.totalorder %s149, %s150
      %p161 = scmp.eq.s32.totalorder %s32, 0
      %p162 = por %p160, %p161
      %p163 = scmp.ne.s32.totalorder %s149, %s150
      %p164 = scmp.eq.s32.totalorder %s33, 1
      %p165 = por %p163, %p164
      %p167 = scmp.ne.s32.totalorder %s150, %s166
      %p168 = scmp.eq.s32.totalorder %s33, 0
      %p169 = por %p167, %p168
      %s170 = sadd.s32 %s34, %s35
      %s171 = sadd.s32 %s53, %s49
      %s172 = ssub.s32 %s170, %s171
      %p173 = scmp.eq.s32.totalorder %s172, 0
      %s175 = sadd.s32 %s174, 1
      %s176 = scalar_select %p173, %s174, %s175
      %p179 = pneg %p173
      %p180 = scmp.eq.s32.totalorder %s27, 1
      %p181 = por %p179, %p180
      %p182 = scmp.ne.s32.totalorder %s174, %s177
      %p183 = scmp.eq.s32.totalorder %s27, 0
      %p184 = por %p182, %p183
      %p185 = scmp.ne.s32.totalorder %s174, %s177
      %p186 = scmp.eq.s32.totalorder %s32, 1
      %p187 = por %p185, %p186
      %p188 = scmp.ne.s32.totalorder %s177, %s178
      %p189 = scmp.eq.s32.totalorder %s32, 0
      %p190 = por %p188, %p189
      %p191 = scmp.ne.s32.totalorder %s177, %s178
      %p192 = scmp.eq.s32.totalorder %s33, 1
      %p193 = por %p191, %p192
      %p195 = scmp.ne.s32.totalorder %s178, %s194
      %p196 = scmp.eq.s32.totalorder %s33, 0
      %p197 = por %p195, %p196
      %s198 = sadd.s32 %s34, %s35
      %s199 = sadd.s32 %s53, %s49
      %s200 = ssub.s32 %s198, %s199
      %p201 = scmp.eq.s32.totalorder %s200, 0
      %s203 = sadd.s32 %s202, 1
      %s204 = scalar_select %p201, %s202, %s203
      %p207 = pneg %p201
      %p208 = scmp.eq.s32.totalorder %s27, 1
      %p209 = por %p207, %p208
      %p210 = scmp.ne.s32.totalorder %s202, %s205
      %p211 = scmp.eq.s32.totalorder %s27, 0
      %p212 = por %p210, %p211
      %p213 = scmp.ne.s32.totalorder %s202, %s205
      %p214 = scmp.eq.s32.totalorder %s32, 1
      %p215 = por %p213, %p214
      %p216 = scmp.ne.s32.totalorder %s205, %s206
      %p217 = scmp.eq.s32.totalorder %s32, 0
      %p218 = por %p216, %p217
      %p219 = scmp.ne.s32.totalorder %s205, %s206
      %p220 = scmp.eq.s32.totalorder %s33, 1
      %p221 = por %p219, %p220
      %p223 = scmp.ne.s32.totalorder %s206, %s222
      %p224 = scmp.eq.s32.totalorder %s33, 0
      %p225 = por %p223, %p224
      %p226 = scmp.le.s32.totalorder 1, %s27
      %p227 = scmp.lt.s32.totalorder %s27, 3
      %p228 = pnand %p226, %p227
      %p229 = pneg %p228
      // Predicated region
      $region9: #{tpu_custom_call.1} parent=5 // pred_check
        _
      $region10: #{tpu_custom_call.1} parent=5 // pred_check_branch
        %231 = sbr.rel (%p228) target = $region12
      $region11: #{tpu_custom_call.1} parent=5 // pred_region
        %s232 = ssub.s32 %s27, 1
      $region12: #{tpu_custom_call.1} parent=5 // pred_fallthru
        _
      %p233 = scmp.lt.s32.totalorder %s27, 2
      // Predicated region
      $region13: #{tpu_custom_call.1} parent=5 // pred_check
        %p234 = pneg %p233
      $region14: #{tpu_custom_call.1} parent=5 // pred_check_branch
        %236 = sbr.rel (%p234) target = $region16
      $region15: #{tpu_custom_call.1} parent=5 // pred_region
        // Predicated region
        $region17: #{tpu_custom_call.1} parent=15 // pred_check
          %p237 = pneg %p70
        $region18: #{tpu_custom_call.1} parent=15 // pred_check_branch
          %239 = sbr.rel (%p237) target = $region20
        $region19: #{tpu_custom_call.1} parent=15 // pred_region
          %s240 = sand.u32 %s60, 1
          %s241 = scalar_lea.sflag [#allocation3], %s240
          %s242 = sand.u32 %s60, 1
          %s243 = smul.addr %s242, 8
          %s244 = scalar_lea.vmem [#allocation2], %s243
          %s245 = sadd.s32 %s35, %s36
          %247 = vsyncadd %s241, 0
          %s248 = smul.addr %s34, 4
          %s249 = sadd.s32 %s245, %s248
          %s250 = smul.addr %s249, 2
          %s251 = scalar_lea.hbm %s0, %s250
          %s252 = sshll.u32 %s251, 4
          %s253 = int_to_ptr.hbm [resolvable:$true] %s252
          %s254 = sshll.u32 %s244, 4
          %s255 = int_to_ptr.vmem [resolvable:$true] %s254
          %260 = dma.hbm_to_vmem [thread:$0]  %s253, 128, %s255, %s241, 32, 32, 2
        $region20: #{tpu_custom_call.1} parent=15 // pred_fallthru
          _
        // Predicated region
        $region21: #{tpu_custom_call.1} parent=15 // pred_check
          %p261 = pneg %p100
        $region22: #{tpu_custom_call.1} parent=15 // pred_check_branch
          %263 = sbr.rel (%p261) target = $region24
        $region23: #{tpu_custom_call.1} parent=15 // pred_region
          %s264 = sand.u32 %s90, 1
          %s265 = scalar_lea.sflag [#allocation6], %s264
          %s266 = sand.u32 %s90, 1
          %s267 = smul.addr %s266, 2
          %s268 = scalar_lea.vmem [#allocation5], %s267
          %s269 = sadd.s32 %s35, %s36
          %271 = vsyncadd %s265, 0
          %s272 = sadd.s32 %s269, %s34
          %s273 = smul.addr %s272, 2
          %s274 = scalar_lea.hbm %s1, %s273
          %s276 = sshll.u32 %s274, 4
          %s277 = int_to_ptr.hbm [resolvable:$true] %s276
          %s278 = sshll.u32 %s268, 4
          %s279 = int_to_ptr.vmem [resolvable:$true] %s278
          %281 = dma.hbm_to_vmem [thread:$0]  %s277, 32, %s279, %s265
        $region24: #{tpu_custom_call.1} parent=15 // pred_fallthru
          _
      $region16: #{tpu_custom_call.1} parent=5 // pred_fallthru
        _
      %p282 = scmp.le.s32.totalorder 1, %s27
      %p283 = scmp.lt.s32.totalorder %s27, 3
      %p284 = pnand %p282, %p283
      %p285 = pneg %p284
      // Predicated region
      $region25: #{tpu_custom_call.1} parent=5 // pred_check
        _
      $region26: #{tpu_custom_call.1} parent=5 // pred_check_branch
        %287 = sbr.rel (%p284) target = $region28
      $region27: #{tpu_custom_call.1} parent=5 // pred_region
        %s288 = ssub.s32 %s27, 1
        %s289 = sand.u32 %s63, 1
        %s290 = scalar_lea.sflag [#allocation3], %s289
        %s291 = sand.u32 %s63, 1
        %s292 = smul.addr %s291, 8
        %s293 = scalar_lea.vmem [#allocation2], %s292
        // Predicated region
        $region29: #{tpu_custom_call.1} parent=27 // pred_check
          %p294 = pneg %p76
        $region30: #{tpu_custom_call.1} parent=27 // pred_check_branch
          %296 = sbr.rel (%p294) target = $region32
        $region31: #{tpu_custom_call.1} parent=27 // pred_region
          %298 = dma.done %s290, 128
        $region32: #{tpu_custom_call.1} parent=27 // pred_fallthru
          _
        %s299 = sand.u32 %s93, 1
        %s300 = scalar_lea.sflag [#allocation6], %s299
        %s301 = sand.u32 %s93, 1
        %s302 = smul.addr %s301, 2
        %s303 = scalar_lea.vmem [#allocation5], %s302
        // Predicated region
        $region33: #{tpu_custom_call.1} parent=27 // pred_check
          %p304 = pneg %p106
        $region34: #{tpu_custom_call.1} parent=27 // pred_check_branch
          %306 = sbr.rel (%p304) target = $region36
        $region35: #{tpu_custom_call.1} parent=27 // pred_region
          %308 = dma.done %s300, 32
        $region36: #{tpu_custom_call.1} parent=27 // pred_fallthru
          _
        %s309 = sand.u32 %s63, 1
        %s310 = scalar_lea.sflag [#allocation3], %s309
        %s311 = sand.u32 %s63, 1
        %s312 = smul.addr %s311, 8
        %s313 = scalar_lea.vmem [#allocation2], %s312
        %p314 = pneg %p76
        %p315 = pneg %p73
        %s316 = sand.u32 %s93, 1
        %s317 = scalar_lea.sflag [#allocation6], %s316
        %s318 = sand.u32 %s93, 1
        %s319 = smul.addr %s318, 2
        %s320 = scalar_lea.vmem [#allocation5], %s319
        %p321 = pneg %p106
        %p322 = pneg %p103
        %p323 = pneg %p134
        %p324 = pneg %p131
        %s325 = sand.u32 %s121, 1
        %s326 = scalar_lea.sflag [#allocation4], %s325
        %s327 = sand.u32 %s121, 1
        %s328 = smul.addr %s327, 2
        %s329 = scalar_lea.vmem [#allocation7], %s328
        %p330 = pneg %p162
        %p331 = pneg %p159
        %s332 = sand.u32 %s32, 1
        %s333 = scalar_lea.sflag [#allocation9], %s332
        %s334 = sand.u32 %s149, 1
        %s335 = smul.addr %s334, 2
        %s336 = scalar_lea.vmem [#allocation8], %s335
        %p337 = pneg %p190
        %p338 = pneg %p187
        %s339 = sand.u32 %s32, 1
        %s340 = scalar_lea.sflag [#allocation9], %s339
        %s341 = sand.u32 %s177, 1
        %s342 = smul.addr %s341, 8
        %s343 = scalar_lea.vmem [#allocation10], %s342
        %p344 = pneg %p218
        %p345 = pneg %p215
        %s346 = sand.u32 %s205, 1
        %s347 = scalar_lea.sflag [#allocation12], %s346
        %s348 = sand.u32 %s205, 1
        %s349 = smul.addr %s348, 8
        %s350 = scalar_lea.vmem [#allocation11], %s349
        %s351 = sadd.s32 %s38, %s39
        %s352 = sadd.s32 %s38, %s39
        %s353 = sadd.s32 %s37, %s38
        %s354 = sadd.s32 %s37, %s38
        %s355 = sadd.s32 %s37, %s38
        %s356 = sadd.s32 %s37, %s38
        %p357 = scmp.eq.s32.totalorder %s39, 0
        // Predicated region
        $region37: #{tpu_custom_call.1} parent=27 // pred_check
          %p358 = pneg %p357
        $region38: #{tpu_custom_call.1} parent=27 // pred_check_branch
          %360 = sbr.rel (%p358) target = $region40
        $region39: #{tpu_custom_call.1} parent=27 // pred_region
          %361 = vst [vmem:[%s329] sm:$0x3] 0.0
          %362 = vst [vmem:[%s336] sm:$0x3] 0.0
          %363 = vst [vmem:[%s343] sm:$0x3] 0.0
          %364 = vst [vmem:[%s343 + $0x2] sm:$0x3] 0.0
          %365 = vst [vmem:[%s343 + $0x4] sm:$0x3] 0.0
          %366 = vst [vmem:[%s343 + $0x6] sm:$0x3] 0.0
          %367 = vst [vmem:[%s350] sm:$0x3] 0.0
          %368 = vst [vmem:[%s350 + $0x2] sm:$0x3] 0.0
          %369 = vst [vmem:[%s350 + $0x4] sm:$0x3] 0.0
          %370 = vst [vmem:[%s350 + $0x6] sm:$0x3] 0.0
        $region40: #{tpu_custom_call.1} parent=27 // pred_fallthru
          _
        %v371 = vld [vmem:[%s303] sm:$0x3]
        %v372 = vld [vmem:[%s293] sm:$0x3]
        %s373 = scalar_lea.vmem %s293, 2 [#allocation2]
        %v374 = vld [vmem:[%s373] sm:$0x3]
        %v375 = vmax.f32 %v372, %v374
        %s376 = scalar_lea.vmem %s293, 4 [#allocation2]
        %v377 = vld [vmem:[%s376] sm:$0x3]
        %v378 = vmax.f32 %v375, %v377
        %s379 = scalar_lea.vmem %s293, 6 [#allocation2]
        %v380 = vld [vmem:[%s379] sm:$0x3]
        %v381 = vmax.f32 %v378, %v380
        %v382 = vsub.f32 %v372, %v381
        %v383 = vmul.f32 %v382, 1.442695
        %v384 = vpow.pop %v383
        %v385 = vadd.f32 %v384, 0.0
        %vm386 = vcmp.eq.s32.totalorder %v371, 0
        %v387 = vsel %vm386, %v382, 0.0
        %v388 = vsub.f32 %v374, %v381
        %v389 = vmul.f32 %v388, 1.442695
        %v390 = vpow.pop %v389
        %v391 = vadd.f32 %v385, %v390
        %vm392 = vcmp.eq.s32.totalorder %v371, 1
        %v393 = vsel %vm392, %v388, %v387
        %v394 = vsub.f32 %v377, %v381
        %v395 = vmul.f32 %v394, 1.442695
        %v396 = vpow.pop %v395
        %v397 = vadd.f32 %v391, %v396
        %vm398 = vcmp.eq.s32.totalorder %v371, 2
        %v399 = vsel %vm398, %v394, %v393
        %v400 = vsub.f32 %v380, %v381
        %v401 = vmul.f32 %v400, 1.442695
        %v402 = vpow.pop %v401
        %v403 = vadd.f32 %v397, %v402
        %vm404 = vcmp.eq.s32.totalorder %v371, 3
        %v405 = vsel %vm404, %v400, %v399
        %v406 = vrcp.pop %v403
        %v407 = vmul.f32 %v403, %v406
        %v408 = vsub.f32 2.0, %v407
        %v409 = vmul.f32 %v406, %v408
        %v410 = vlog2.pop %v403
        %v411 = vmul.f32 %v410, 0.6931472
        %vm412 = vcmp.ne.s32.totalorder %v371, 4294967196
        %v413 = vsub.f32 %v405, %v411
        %v414 = vmul.f32 %v405, 1.442695
        %v415 = vpow.pop %v414
        %v416 = vmul.f32 %v415, %v409
        %v417 = vsel %vm412, 1, 0
        %v418 = vcvt.s32.f32 %v417
        %v419 = vmul.f32 %v384, %v409
        %v420 = vld [vmem:[%s343] sm:$0x3]
        %v421 = vsel %vm386, %v416, 0.0
        %v422 = vadd.f32 %v420, %v421
        %423 = vst [vmem:[%s343] sm:$0x3] %v422
        %v424 = vld [vmem:[%s350] sm:$0x3]
        %v425 = vsel %vm386, 1, 0
        %v426 = vcvt.s32.f32 %v425
        %v427 = vadd.f32 %v419, %v426
        %v428 = vadd.f32 %v424, %v427
        %429 = vst [vmem:[%s350] sm:$0x3] %v428
        %v430 = vld [vmem:[%s373] sm:$0x3]
        %v431 = vsub.f32 %v430, %v381
        %v432 = vmul.f32 %v431, 1.442695
        %v433 = vpow.pop %v432
        %v434 = vmul.f32 %v433, %v409
        %s435 = scalar_lea.vmem %s343, 2 [#allocation10]
        %v436 = vld [vmem:[%s435] sm:$0x3]
        %v437 = vsel %vm392, %v416, 0.0
        %v438 = vadd.f32 %v436, %v437
        %439 = vst [vmem:[%s435] sm:$0x3] %v438
        %s440 = scalar_lea.vmem %s350, 2 [#allocation11]
        %v441 = vld [vmem:[%s440] sm:$0x3]
        %v442 = vsel %vm392, 1, 0
        %v443 = vcvt.s32.f32 %v442
        %v444 = vadd.f32 %v434, %v443
        %v445 = vadd.f32 %v441, %v444
        %446 = vst [vmem:[%s440] sm:$0x3] %v445
        %v447 = vld [vmem:[%s376] sm:$0x3]
        %v448 = vsub.f32 %v447, %v381
        %v449 = vmul.f32 %v448, 1.442695
        %v450 = vpow.pop %v449
        %v451 = vmul.f32 %v450, %v409
        %s452 = scalar_lea.vmem %s343, 4 [#allocation10]
        %v453 = vld [vmem:[%s452] sm:$0x3]
        %v454 = vsel %vm398, %v416, 0.0
        %v455 = vadd.f32 %v453, %v454
        %456 = vst [vmem:[%s452] sm:$0x3] %v455
        %s457 = scalar_lea.vmem %s350, 4 [#allocation11]
        %v458 = vld [vmem:[%s457] sm:$0x3]
        %v459 = vsel %vm398, 1, 0
        %v460 = vcvt.s32.f32 %v459
        %v461 = vadd.f32 %v451, %v460
        %v462 = vadd.f32 %v458, %v461
        %463 = vst [vmem:[%s457] sm:$0x3] %v462
        %v464 = vld [vmem:[%s379] sm:$0x3]
        %v465 = vsub.f32 %v464, %v381
        %v466 = vmul.f32 %v465, 1.442695
        %v467 = vpow.pop %v466
        %v468 = vmul.f32 %v467, %v409
        %s469 = scalar_lea.vmem %s343, 6 [#allocation10]
        %v470 = vld [vmem:[%s469] sm:$0x3]
        %v471 = vsel %vm404, %v416, 0.0
        %v472 = vadd.f32 %v470, %v471
        %473 = vst [vmem:[%s469] sm:$0x3] %v472
        %s474 = scalar_lea.vmem %s350, 6 [#allocation11]
        %v475 = vld [vmem:[%s474] sm:$0x3]
        %v476 = vsel %vm404, 1, 0
        %v477 = vcvt.s32.f32 %v476
        %v478 = vadd.f32 %v468, %v477
        %v479 = vadd.f32 %v475, %v478
        %480 = vst [vmem:[%s474] sm:$0x3] %v479
        %v481 = vsub.f32 1.0, %v416
        %v482 = vmul.f32 %v481, %v481
        %v483 = vmul.f32 %v482, %v413
        %v484 = vsub.f32 0.0, %v483
        %v485 = vmul.f32 %v484, %v418
        %v486 = vld [vmem:[%s329] sm:$0x3]
        %v487 = vadd.f32 %v486, %v485
        %488 = vst [vmem:[%s329] sm:$0x3] %v487
        %v489 = vld [vmem:[%s336] sm:$0x3]
        %v490 = vadd.f32 %v489, %v418
        %491 = vst [vmem:[%s336] sm:$0x3] %v490
        %s492 = sand.u32 %s121, 1
        %s493 = scalar_lea.sflag [#allocation4], %s492
        %s494 = sand.u32 %s121, 1
        %s495 = smul.addr %s494, 2
        %s496 = scalar_lea.vmem [#allocation7], %s495
        %s497 = sand.u32 %s32, 1
        %s498 = scalar_lea.sflag [#allocation9], %s497
        %s499 = sand.u32 %s149, 1
        %s500 = smul.addr %s499, 2
        %s501 = scalar_lea.vmem [#allocation8], %s500
        %s502 = sand.u32 %s32, 1
        %s503 = scalar_lea.sflag [#allocation9], %s502
        %s504 = sand.u32 %s177, 1
        %s505 = smul.addr %s504, 8
        %s506 = scalar_lea.vmem [#allocation10], %s505
        %s507 = sand.u32 %s205, 1
        %s508 = scalar_lea.sflag [#allocation12], %s507
        %s509 = sand.u32 %s205, 1
        %s510 = smul.addr %s509, 8
        %s511 = scalar_lea.vmem [#allocation11], %s510
        // Predicated region
        $region41: #{tpu_custom_call.1} parent=27 // pred_check
          %p512 = pneg %p131
        $region42: #{tpu_custom_call.1} parent=27 // pred_check_branch
          %514 = sbr.rel (%p512) target = $region44
        $region43: #{tpu_custom_call.1} parent=27 // pred_region
          %s515 = sadd.s32 %s37, %s38
          %517 = vsyncadd %s493, 0
          %s518 = smul.addr %s515, 2
          %s519 = scalar_lea.hbm %s2, %s518
          %s521 = sshll.u32 %s496, 4
          %s522 = int_to_ptr.vmem [resolvable:$true] %s521
          %s523 = sshll.u32 %s519, 4
          %s524 = int_to_ptr.hbm [resolvable:$true] %s523
          %526 = dma.vmem_to_hbm [thread:$0]  %s522, 32, %s524, %s493
        $region44: #{tpu_custom_call.1} parent=27 // pred_fallthru
          _
        // Predicated region
        $region45: #{tpu_custom_call.1} parent=27 // pred_check
          %p527 = pneg %p159
        $region46: #{tpu_custom_call.1} parent=27 // pred_check_branch
          %529 = sbr.rel (%p527) target = $region48
        $region47: #{tpu_custom_call.1} parent=27 // pred_region
          %s530 = sadd.s32 %s37, %s38
          %532 = vsyncadd %s498, 0
          %s533 = smul.addr %s530, 2
          %s534 = scalar_lea.hbm %s3, %s533
          %s536 = sshll.u32 %s501, 4
          %s537 = int_to_ptr.vmem [resolvable:$true] %s536
          %s538 = sshll.u32 %s534, 4
          %s539 = int_to_ptr.hbm [resolvable:$true] %s538
          %541 = dma.vmem_to_hbm [thread:$0]  %s537, 32, %s539, %s498
        $region48: #{tpu_custom_call.1} parent=27 // pred_fallthru
          _
        // Predicated region
        $region49: #{tpu_custom_call.1} parent=27 // pred_check
          %p542 = pneg %p187
        $region50: #{tpu_custom_call.1} parent=27 // pred_check_branch
          %544 = sbr.rel (%p542) target = $region52
        $region51: #{tpu_custom_call.1} parent=27 // pred_region
          %s545 = sadd.s32 %s37, %s38
          %547 = vsyncadd %s503, 0
          %s548 = smul.addr %s545, 4
          %s549 = smul.addr %s548, 2
          %s550 = scalar_lea.hbm %s4, %s549
          %s551 = sshll.u32 %s506, 4
          %s552 = int_to_ptr.vmem [resolvable:$true] %s551
          %s553 = sshll.u32 %s550, 4
          %s554 = int_to_ptr.hbm [resolvable:$true] %s553
          %559 = dma.vmem_to_hbm [thread:$0]  %s552, 128, %s554, %s503, 32, 32, 2
        $region52: #{tpu_custom_call.1} parent=27 // pred_fallthru
          _
        // Predicated region
        $region53: #{tpu_custom_call.1} parent=27 // pred_check
          %p560 = pneg %p215
        $region54: #{tpu_custom_call.1} parent=27 // pred_check_branch
          %562 = sbr.rel (%p560) target = $region56
        $region55: #{tpu_custom_call.1} parent=27 // pred_region
          %s563 = sadd.s32 %s37, %s38
          %565 = vsyncadd %s508, 0
          %s566 = smul.addr %s563, 4
          %s567 = smul.addr %s566, 2
          %s568 = scalar_lea.hbm %s5, %s567
          %s569 = sshll.u32 %s511, 4
          %s570 = int_to_ptr.vmem [resolvable:$true] %s569
          %s571 = sshll.u32 %s568, 4
          %s572 = int_to_ptr.hbm [resolvable:$true] %s571
          %577 = dma.vmem_to_hbm [thread:$0]  %s570, 128, %s572, %s508, 32, 32, 2
        $region56: #{tpu_custom_call.1} parent=27 // pred_fallthru
          _
      $region28: #{tpu_custom_call.1} parent=5 // pred_fallthru
        _
      %p578 = scmp.le.s32.totalorder 2, %s27
      // Predicated region
      $region57: #{tpu_custom_call.1} parent=5 // pred_check
        %p579 = pneg %p578
      $region58: #{tpu_custom_call.1} parent=5 // pred_check_branch
        %581 = sbr.rel (%p579) target = $region60
      $region59: #{tpu_custom_call.1} parent=5 // pred_region
        %s582 = ssub.s32 %s27, 2
        // Predicated region
        $region61: #{tpu_custom_call.1} parent=59 // pred_check
          %p583 = pneg %p137
        $region62: #{tpu_custom_call.1} parent=59 // pred_check_branch
          %585 = sbr.rel (%p583) target = $region64
        $region63: #{tpu_custom_call.1} parent=59 // pred_region
          %s586 = sand.u32 %s122, 1
          %s587 = scalar_lea.sflag [#allocation4], %s586
          %s588 = sand.u32 %s122, 1
          %s589 = smul.addr %s588, 2
          %s590 = scalar_lea.vmem [#allocation7], %s589
          %592 = dma.done %s587, 32
        $region64: #{tpu_custom_call.1} parent=59 // pred_fallthru
          _
        // Predicated region
        $region65: #{tpu_custom_call.1} parent=59 // pred_check
          %p593 = pneg %p165
        $region66: #{tpu_custom_call.1} parent=59 // pred_check_branch
          %595 = sbr.rel (%p593) target = $region68
        $region67: #{tpu_custom_call.1} parent=59 // pred_region
          %s596 = sand.u32 %s33, 1
          %s597 = scalar_lea.sflag [#allocation9], %s596
          %s598 = sand.u32 %s150, 1
          %s599 = smul.addr %s598, 2
          %s600 = scalar_lea.vmem [#allocation8], %s599
          %602 = dma.done %s597, 32
        $region68: #{tpu_custom_call.1} parent=59 // pred_fallthru
          _
        // Predicated region
        $region69: #{tpu_custom_call.1} parent=59 // pred_check
          %p603 = pneg %p193
        $region70: #{tpu_custom_call.1} parent=59 // pred_check_branch
          %605 = sbr.rel (%p603) target = $region72
        $region71: #{tpu_custom_call.1} parent=59 // pred_region
          %s606 = sand.u32 %s33, 1
          %s607 = scalar_lea.sflag [#allocation9], %s606
          %s608 = sand.u32 %s178, 1
          %s609 = smul.addr %s608, 8
          %s610 = scalar_lea.vmem [#allocation10], %s609
          %612 = dma.done %s607, 128
        $region72: #{tpu_custom_call.1} parent=59 // pred_fallthru
          _
        // Predicated region
        $region73: #{tpu_custom_call.1} parent=59 // pred_check
          %p613 = pneg %p221
        $region74: #{tpu_custom_call.1} parent=59 // pred_check_branch
          %615 = sbr.rel (%p613) target = $region76
        $region75: #{tpu_custom_call.1} parent=59 // pred_region
          %s616 = sand.u32 %s206, 1
          %s617 = scalar_lea.sflag [#allocation12], %s616
          %s618 = sand.u32 %s206, 1
          %s619 = smul.addr %s618, 8
          %s620 = scalar_lea.vmem [#allocation11], %s619
          %622 = dma.done %s617, 128
        $region76: #{tpu_custom_call.1} parent=59 // pred_fallthru
          _
      $region60: #{tpu_custom_call.1} parent=5 // pred_fallthru
        _
    $region6: #{tpu_custom_call.1} parent=1 // loop_footer
      %s31 = sadd.s32 1, %s27
    $region7: #{tpu_custom_call.1} parent=1 // loop_footer_branch
      %26 = sbr.rel target = $region3
    $region8: #{tpu_custom_call.1} parent=1 // loop_exit
      _
    %623 = vsyncpa [#allocation3], 1
    %s624 = scalar_lea.sflag [#allocation3], 1
    %625 = vsyncpa %s624, 1
    %626 = vsyncpa [#allocation6], 1
    %s627 = scalar_lea.sflag [#allocation6], 1
    %628 = vsyncpa %s627, 1
    %629 = vsyncpa [#allocation4], 1
    %s630 = scalar_lea.sflag [#allocation4], 1
    %631 = vsyncpa %s630, 1
    %632 = vsyncpa [#allocation9], 1
    %s633 = scalar_lea.sflag [#allocation9], 1
    %634 = vsyncpa %s633, 1
    %635 = vsyncpa [#allocation12], 1
    %s636 = scalar_lea.sflag [#allocation12], 1
    %637 = vsyncpa %s636, 1

</llo_original>
